<compile_context>
chip_gen: v6e
topology: v6e:2x2x1
jax: 0.10.0
libtpu: 0.0.40
codegen_flags: <defaults>
</compile_context>

<pallas_src>
import jax
import jax.numpy as jnp
from jax.experimental import pallas as pl
from jax.experimental.pallas import tpu as pltpu

# Static widths of the five inputs along the concat axis.
WIDTHS = (50, 80, 90, 5, 20)
ROWS = 250
CAT_W = sum(WIDTHS)          # 245
OUT_W = 2 * CAT_W            # 490


def cat_slice_cat_kernel(x1_ref, x2_ref, x3_ref, x4_ref, x5_ref, o_ref):
    # Single 10-operand concat -> one dense full-width store.  No 245-wide
    # intermediate is materialized; each slab is relaid out directly to both
    # destination lane offsets.
    slabs = (x1_ref[...], x2_ref[...], x3_ref[...], x4_ref[...], x5_ref[...])
    o_ref[...] = jnp.concatenate(slabs + slabs, axis=-1)


def cat_slice_cat(x1, x2, x3, x4, x5):
    xs = (x1, x2, x3, x4, x5)

    # Correctness guards: enforce expected shapes and a single common dtype so
    # jnp.concatenate cannot silently dtype-promote.
    dtype = x1.dtype
    for i, (x, w) in enumerate(zip(xs, WIDTHS)):
        assert x.shape == (1, 1, ROWS, w), (
            f"x{i + 1} has shape {x.shape}, expected {(1, 1, ROWS, w)}")
        assert x.dtype == dtype, (
            f"x{i + 1} dtype {x.dtype} != x1 dtype {dtype}")

    # Squeeze (1, 1, R, W) -> (R, W) for the kernel.
    slabs = [x.reshape(ROWS, x.shape[-1]) for x in xs]

    itemsize = jnp.dtype(dtype).itemsize
    # Read the five slabs once (CAT_W total), write the doubled row (OUT_W).
    bytes_accessed = (CAT_W + OUT_W) * ROWS * itemsize

    out2d = pl.pallas_call(
        cat_slice_cat_kernel,
        out_shape=jax.ShapeDtypeStruct((ROWS, OUT_W), dtype),
        in_specs=[pl.BlockSpec(memory_space=pltpu.MemorySpace.VMEM)] * 5,
        out_specs=pl.BlockSpec(memory_space=pltpu.MemorySpace.VMEM),
        cost_estimate=pl.CostEstimate(
            flops=0, transcendentals=0, bytes_accessed=bytes_accessed
        ),
    )(*slabs)
    return out2d.reshape(1, 1, ROWS, OUT_W)


if __name__ == "__main__":
    key = jax.random.PRNGKey(0)
    k1, k2, k3, k4, k5 = jax.random.split(key, 5)
    x1 = jax.random.normal(k1, (1, 1, ROWS, 50), dtype=jnp.float32)
    x2 = jax.random.normal(k2, (1, 1, ROWS, 80), dtype=jnp.float32)
    x3 = jax.random.normal(k3, (1, 1, ROWS, 90), dtype=jnp.float32)
    x4 = jax.random.normal(k4, (1, 1, ROWS, 5), dtype=jnp.float32)
    x5 = jax.random.normal(k5, (1, 1, ROWS, 20), dtype=jnp.float32)

    out = cat_slice_cat(x1, x2, x3, x4, x5)
    out = jax.block_until_ready(out)

    # Reference check (plain JAX) of the intended semantics.
    v1 = jnp.concatenate([x1, x2, x3, x4, x5], axis=-1)
    ref = jnp.concatenate([v1, v1], axis=-1)
    assert out.shape == (1, 1, ROWS, OUT_W), out.shape
    assert out.dtype == x1.dtype, out.dtype
    assert jnp.allclose(out, ref), "mismatch vs reference"

    print("KERNEL_OK")
</pallas_src>

<mosaic_0001>
module attributes {stable_mosaic.version = 11 : i64} {
  func.func @cat_slice_cat_kernel(%arg0: memref<250x50xf32, #tpu.memory_space<vmem>>, %arg1: memref<250x80xf32, #tpu.memory_space<vmem>>, %arg2: memref<250x90xf32, #tpu.memory_space<vmem>>, %arg3: memref<250x5xf32, #tpu.memory_space<vmem>>, %arg4: memref<250x20xf32, #tpu.memory_space<vmem>>, %arg5: memref<250x490xf32, #tpu.memory_space<vmem>>) attributes {dimension_semantics = [], scalar_prefetch = 0 : i64, scratch_operands = 0 : i64, tpu.core_type = #tpu.core_type<tc>} {
    %c0 = arith.constant 0 : index
    %c0_0 = arith.constant 0 : index
    %0 = vector.load %arg0[%c0, %c0_0] : memref<250x50xf32, #tpu.memory_space<vmem>>, vector<250x50xf32>
    %c0_1 = arith.constant 0 : index
    %c0_2 = arith.constant 0 : index
    %1 = vector.load %arg1[%c0_1, %c0_2] : memref<250x80xf32, #tpu.memory_space<vmem>>, vector<250x80xf32>
    %c0_3 = arith.constant 0 : index
    %c0_4 = arith.constant 0 : index
    %2 = vector.load %arg2[%c0_3, %c0_4] : memref<250x90xf32, #tpu.memory_space<vmem>>, vector<250x90xf32>
    %c0_5 = arith.constant 0 : index
    %c0_6 = arith.constant 0 : index
    %3 = vector.load %arg3[%c0_5, %c0_6] : memref<250x5xf32, #tpu.memory_space<vmem>>, vector<250x5xf32>
    %c0_7 = arith.constant 0 : index
    %c0_8 = arith.constant 0 : index
    %4 = vector.load %arg4[%c0_7, %c0_8] : memref<250x20xf32, #tpu.memory_space<vmem>>, vector<250x20xf32>
    %5 = tpu.concatenate %0, %1, %2, %3, %4, %0, %1, %2, %3, %4 in 1 : vector<250x50xf32>, vector<250x80xf32>, vector<250x90xf32>, vector<250x5xf32>, vector<250x20xf32>, vector<250x50xf32>, vector<250x80xf32>, vector<250x90xf32>, vector<250x5xf32>, vector<250x20xf32> -> vector<250x490xf32>
    %c0_9 = arith.constant 0 : index
    %c0_10 = arith.constant 0 : index
    %6 = vector.load %arg5[%c0_9, %c0_10] : memref<250x490xf32, #tpu.memory_space<vmem>>, vector<250x490xf32>
    tpu.vector_store %arg5[%c0_9, %c0_10], %5 {strides = array<i32>} : memref<250x490xf32, #tpu.memory_space<vmem>>, vector<250x490xf32>,
    return
  }
}

</mosaic_0001>

<llo_original>
// kernel: tpu_custom_call.1
$region0: #{tpu_custom_call.1}
  #allocation0 [shape = 'u32[]', space=smem, size = 0x4, offset = 0x4, fixed_abs, tag = 'smem constant byte address 0x4 - core index']
  #allocation1 [shape = 'u32[144,128]{1,0:T(1,128)}', space=vmem, size = 0x12000, scoped, tag = 'internal scratch']
  %s0 = inlined_call_operand.vmem [shape: f32[250,50], index: 0, kind: input, shape index: {}]
  %s1 = inlined_call_operand.vmem [shape: f32[250,80], index: 1, kind: input, shape index: {}]
  %s2 = inlined_call_operand.vmem [shape: f32[250,90], index: 2, kind: input, shape index: {}]
  %s3 = inlined_call_operand.vmem [shape: f32[250,5], index: 3, kind: input, shape index: {}]
  %s4 = inlined_call_operand.vmem [shape: f32[250,20], index: 4, kind: input, shape index: {}]
  %s5 = inlined_call_operand.vmem [shape: f32[250,490], index: 5, kind: output, shape index: {}]
  %s6 = sld [smem:[#allocation0]]
  $region30: #{tpu_custom_call.1} parent=0
    _
  %s8 = ssub.s32 1, %s6
  %s9 = scalar_select 0, %s8, %s6
  // Predicated region
  $region2: #{tpu_custom_call.1} parent=0 // pred_check
    _
  $region3: #{tpu_custom_call.1} parent=0 // pred_check_branch
    %11 = sbr.rel (0) target = $region5
  $region4: #{tpu_custom_call.1} parent=0 // pred_region
    _
  $region5: #{tpu_custom_call.1} parent=0 // pred_fallthru
    _
  // Predicated region
  $region6: #{tpu_custom_call.1} parent=0 // pred_check
    _
  $region7: #{tpu_custom_call.1} parent=0 // pred_check_branch
    %13 = sbr.rel (0) target = $region9
  $region8: #{tpu_custom_call.1} parent=0 // pred_region
    _
  $region9: #{tpu_custom_call.1} parent=0 // pred_fallthru
    _
  // Predicated region
  $region10: #{tpu_custom_call.1} parent=0 // pred_check
    _
  $region11: #{tpu_custom_call.1} parent=0 // pred_check_branch
    %15 = sbr.rel (0) target = $region13
  $region12: #{tpu_custom_call.1} parent=0 // pred_region
    _
  $region13: #{tpu_custom_call.1} parent=0 // pred_fallthru
    _
  // Predicated region
  $region14: #{tpu_custom_call.1} parent=0 // pred_check
    _
  $region15: #{tpu_custom_call.1} parent=0 // pred_check_branch
    %17 = sbr.rel (0) target = $region17
  $region16: #{tpu_custom_call.1} parent=0 // pred_region
    _
  $region17: #{tpu_custom_call.1} parent=0 // pred_fallthru
    _
  // Predicated region
  $region18: #{tpu_custom_call.1} parent=0 // pred_check
    _
  $region19: #{tpu_custom_call.1} parent=0 // pred_check_branch
    %19 = sbr.rel (0) target = $region21
  $region20: #{tpu_custom_call.1} parent=0 // pred_region
    _
  $region21: #{tpu_custom_call.1} parent=0 // pred_fallthru
    _
  %v20 = vld [vmem:[%s0] sm:$0xff]
  %v21 = vld [vmem:[%s0 + $0x8] sm:$0xff]
  %v22 = vld [vmem:[%s0 + $0x10] sm:$0xff]
  %v23 = vld [vmem:[%s0 + $0x18] sm:$0xff]
  %v24 = vld [vmem:[%s0 + $0x20] sm:$0xff]
  %v25 = vld [vmem:[%s0 + $0x28] sm:$0xff]
  %v26 = vld [vmem:[%s0 + $0x30] sm:$0xff]
  %v27 = vld [vmem:[%s0 + $0x38] sm:$0xff]
  %v28 = vld [vmem:[%s0 + $0x40] sm:$0xff]
  %v29 = vld [vmem:[%s0 + $0x48] sm:$0xff]
  %v30 = vld [vmem:[%s0 + $0x50] sm:$0xff]
  %v31 = vld [vmem:[%s0 + $0x58] sm:$0xff]
  %v32 = vld [vmem:[%s0 + $0x60] sm:$0xff]
  %v33 = vld [vmem:[%s0 + $0x68] sm:$0xff]
  %v34 = vld [vmem:[%s0 + $0x70] sm:$0xff]
  %v35 = vld [vmem:[%s0 + $0x78] sm:$0xff]
  %v36 = vld [vmem:[%s0 + $0x80] sm:$0xff]
  %v37 = vld [vmem:[%s0 + $0x88] sm:$0xff]
  %v38 = vld [vmem:[%s0 + $0x90] sm:$0xff]
  %v39 = vld [vmem:[%s0 + $0x98] sm:$0xff]
  %v40 = vld [vmem:[%s0 + $0xa0] sm:$0xff]
  %v41 = vld [vmem:[%s0 + $0xa8] sm:$0xff]
  %v42 = vld [vmem:[%s0 + $0xb0] sm:$0xff]
  %v43 = vld [vmem:[%s0 + $0xb8] sm:$0xff]
  %v44 = vld [vmem:[%s0 + $0xc0] sm:$0xff]
  %v45 = vld [vmem:[%s0 + $0xc8] sm:$0xff]
  %v46 = vld [vmem:[%s0 + $0xd0] sm:$0xff]
  %v47 = vld [vmem:[%s0 + $0xd8] sm:$0xff]
  %v48 = vld [vmem:[%s0 + $0xe0] sm:$0xff]
  %v49 = vld [vmem:[%s0 + $0xe8] sm:$0xff]
  %v50 = vld [vmem:[%s0 + $0xf0] sm:$0xff]
  %v51 = vld [vmem:[%s0 + $0xf8] sm:$0x3]
  %v52 = vld [vmem:[%s1] sm:$0xff]
  %v53 = vld [vmem:[%s1 + $0x8] sm:$0xff]
  %v54 = vld [vmem:[%s1 + $0x10] sm:$0xff]
  %v55 = vld [vmem:[%s1 + $0x18] sm:$0xff]
  %v56 = vld [vmem:[%s1 + $0x20] sm:$0xff]
  %v57 = vld [vmem:[%s1 + $0x28] sm:$0xff]
  %v58 = vld [vmem:[%s1 + $0x30] sm:$0xff]
  %v59 = vld [vmem:[%s1 + $0x38] sm:$0xff]
  %v60 = vld [vmem:[%s1 + $0x40] sm:$0xff]
  %v61 = vld [vmem:[%s1 + $0x48] sm:$0xff]
  %v62 = vld [vmem:[%s1 + $0x50] sm:$0xff]
  %v63 = vld [vmem:[%s1 + $0x58] sm:$0xff]
  %v64 = vld [vmem:[%s1 + $0x60] sm:$0xff]
  %v65 = vld [vmem:[%s1 + $0x68] sm:$0xff]
  %v66 = vld [vmem:[%s1 + $0x70] sm:$0xff]
  %v67 = vld [vmem:[%s1 + $0x78] sm:$0xff]
  %v68 = vld [vmem:[%s1 + $0x80] sm:$0xff]
  %v69 = vld [vmem:[%s1 + $0x88] sm:$0xff]
  %v70 = vld [vmem:[%s1 + $0x90] sm:$0xff]
  %v71 = vld [vmem:[%s1 + $0x98] sm:$0xff]
  %v72 = vld [vmem:[%s1 + $0xa0] sm:$0xff]
  %v73 = vld [vmem:[%s1 + $0xa8] sm:$0xff]
  %v74 = vld [vmem:[%s1 + $0xb0] sm:$0xff]
  %v75 = vld [vmem:[%s1 + $0xb8] sm:$0xff]
  %v76 = vld [vmem:[%s1 + $0xc0] sm:$0xff]
  %v77 = vld [vmem:[%s1 + $0xc8] sm:$0xff]
  %v78 = vld [vmem:[%s1 + $0xd0] sm:$0xff]
  %v79 = vld [vmem:[%s1 + $0xd8] sm:$0xff]
  %v80 = vld [vmem:[%s1 + $0xe0] sm:$0xff]
  %v81 = vld [vmem:[%s1 + $0xe8] sm:$0xff]
  %v82 = vld [vmem:[%s1 + $0xf0] sm:$0xff]
  %v83 = vld [vmem:[%s1 + $0xf8] sm:$0x3]
  %v84 = vld [vmem:[%s2] sm:$0xff]
  %v85 = vld [vmem:[%s2 + $0x8] sm:$0xff]
  %v86 = vld [vmem:[%s2 + $0x10] sm:$0xff]
  %v87 = vld [vmem:[%s2 + $0x18] sm:$0xff]
  %v88 = vld [vmem:[%s2 + $0x20] sm:$0xff]
  %v89 = vld [vmem:[%s2 + $0x28] sm:$0xff]
  %v90 = vld [vmem:[%s2 + $0x30] sm:$0xff]
  %v91 = vld [vmem:[%s2 + $0x38] sm:$0xff]
  %v92 = vld [vmem:[%s2 + $0x40] sm:$0xff]
  %v93 = vld [vmem:[%s2 + $0x48] sm:$0xff]
  %v94 = vld [vmem:[%s2 + $0x50] sm:$0xff]
  %v95 = vld [vmem:[%s2 + $0x58] sm:$0xff]
  %v96 = vld [vmem:[%s2 + $0x60] sm:$0xff]
  %v97 = vld [vmem:[%s2 + $0x68] sm:$0xff]
  %v98 = vld [vmem:[%s2 + $0x70] sm:$0xff]
  %v99 = vld [vmem:[%s2 + $0x78] sm:$0xff]
  %v100 = vld [vmem:[%s2 + $0x80] sm:$0xff]
  %v101 = vld [vmem:[%s2 + $0x88] sm:$0xff]
  %v102 = vld [vmem:[%s2 + $0x90] sm:$0xff]
  %v103 = vld [vmem:[%s2 + $0x98] sm:$0xff]
  %v104 = vld [vmem:[%s2 + $0xa0] sm:$0xff]
  %v105 = vld [vmem:[%s2 + $0xa8] sm:$0xff]
  %v106 = vld [vmem:[%s2 + $0xb0] sm:$0xff]
  %v107 = vld [vmem:[%s2 + $0xb8] sm:$0xff]
  %v108 = vld [vmem:[%s2 + $0xc0] sm:$0xff]
  %v109 = vld [vmem:[%s2 + $0xc8] sm:$0xff]
  %v110 = vld [vmem:[%s2 + $0xd0] sm:$0xff]
  %v111 = vld [vmem:[%s2 + $0xd8] sm:$0xff]
  %v112 = vld [vmem:[%s2 + $0xe0] sm:$0xff]
  %v113 = vld [vmem:[%s2 + $0xe8] sm:$0xff]
  %v114 = vld [vmem:[%s2 + $0xf0] sm:$0xff]
  %v115 = vld [vmem:[%s2 + $0xf8] sm:$0x3]
  %v116 = vld [vmem:[%s3] sm:$0xff]
  %v117 = vld [vmem:[%s3 + $0x8] sm:$0xff]
  %v118 = vld [vmem:[%s3 + $0x10] sm:$0xff]
  %v119 = vld [vmem:[%s3 + $0x18] sm:$0xff]
  %v120 = vld [vmem:[%s3 + $0x20] sm:$0xff]
  %v121 = vld [vmem:[%s3 + $0x28] sm:$0xff]
  %v122 = vld [vmem:[%s3 + $0x30] sm:$0xff]
  %v123 = vld [vmem:[%s3 + $0x38] sm:$0xff]
  %v124 = vld [vmem:[%s3 + $0x40] sm:$0xff]
  %v125 = vld [vmem:[%s3 + $0x48] sm:$0xff]
  %v126 = vld [vmem:[%s3 + $0x50] sm:$0xff]
  %v127 = vld [vmem:[%s3 + $0x58] sm:$0xff]
  %v128 = vld [vmem:[%s3 + $0x60] sm:$0xff]
  %v129 = vld [vmem:[%s3 + $0x68] sm:$0xff]
  %v130 = vld [vmem:[%s3 + $0x70] sm:$0xff]
  %v131 = vld [vmem:[%s3 + $0x78] sm:$0xff]
  %v132 = vld [vmem:[%s3 + $0x80] sm:$0xff]
  %v133 = vld [vmem:[%s3 + $0x88] sm:$0xff]
  %v134 = vld [vmem:[%s3 + $0x90] sm:$0xff]
  %v135 = vld [vmem:[%s3 + $0x98] sm:$0xff]
  %v136 = vld [vmem:[%s3 + $0xa0] sm:$0xff]
  %v137 = vld [vmem:[%s3 + $0xa8] sm:$0xff]
  %v138 = vld [vmem:[%s3 + $0xb0] sm:$0xff]
  %v139 = vld [vmem:[%s3 + $0xb8] sm:$0xff]
  %v140 = vld [vmem:[%s3 + $0xc0] sm:$0xff]
  %v141 = vld [vmem:[%s3 + $0xc8] sm:$0xff]
  %v142 = vld [vmem:[%s3 + $0xd0] sm:$0xff]
  %v143 = vld [vmem:[%s3 + $0xd8] sm:$0xff]
  %v144 = vld [vmem:[%s3 + $0xe0] sm:$0xff]
  %v145 = vld [vmem:[%s3 + $0xe8] sm:$0xff]
  %v146 = vld [vmem:[%s3 + $0xf0] sm:$0xff]
  %v147 = vld [vmem:[%s3 + $0xf8] sm:$0x3]
  %v148 = vld [vmem:[%s4] sm:$0xff]
  %v149 = vld [vmem:[%s4 + $0x8] sm:$0xff]
  %v150 = vld [vmem:[%s4 + $0x10] sm:$0xff]
  %v151 = vld [vmem:[%s4 + $0x18] sm:$0xff]
  %v152 = vld [vmem:[%s4 + $0x20] sm:$0xff]
  %v153 = vld [vmem:[%s4 + $0x28] sm:$0xff]
  %v154 = vld [vmem:[%s4 + $0x30] sm:$0xff]
  %v155 = vld [vmem:[%s4 + $0x38] sm:$0xff]
  %v156 = vld [vmem:[%s4 + $0x40] sm:$0xff]
  %v157 = vld [vmem:[%s4 + $0x48] sm:$0xff]
  %v158 = vld [vmem:[%s4 + $0x50] sm:$0xff]
  %v159 = vld [vmem:[%s4 + $0x58] sm:$0xff]
  %v160 = vld [vmem:[%s4 + $0x60] sm:$0xff]
  %v161 = vld [vmem:[%s4 + $0x68] sm:$0xff]
  %v162 = vld [vmem:[%s4 + $0x70] sm:$0xff]
  %v163 = vld [vmem:[%s4 + $0x78] sm:$0xff]
  %v164 = vld [vmem:[%s4 + $0x80] sm:$0xff]
  %v165 = vld [vmem:[%s4 + $0x88] sm:$0xff]
  %v166 = vld [vmem:[%s4 + $0x90] sm:$0xff]
  %v167 = vld [vmem:[%s4 + $0x98] sm:$0xff]
  %v168 = vld [vmem:[%s4 + $0xa0] sm:$0xff]
  %v169 = vld [vmem:[%s4 + $0xa8] sm:$0xff]
  %v170 = vld [vmem:[%s4 + $0xb0] sm:$0xff]
  %v171 = vld [vmem:[%s4 + $0xb8] sm:$0xff]
  %v172 = vld [vmem:[%s4 + $0xc0] sm:$0xff]
  %v173 = vld [vmem:[%s4 + $0xc8] sm:$0xff]
  %v174 = vld [vmem:[%s4 + $0xd0] sm:$0xff]
  %v175 = vld [vmem:[%s4 + $0xd8] sm:$0xff]
  %v176 = vld [vmem:[%s4 + $0xe0] sm:$0xff]
  %v177 = vld [vmem:[%s4 + $0xe8] sm:$0xff]
  %v178 = vld [vmem:[%s4 + $0xf0] sm:$0xff]
  %v179 = vld [vmem:[%s4 + $0xf8] sm:$0x3]
  %212 = vrot.lane.b32.xlu0 %v52, 50
  %v213 = vpop.permute.xlu0 %212
  %214 = vrot.lane.b32.xlu0 %v53, 50
  %v215 = vpop.permute.xlu0 %214
  %216 = vrot.lane.b32.xlu0 %v54, 50
  %v217 = vpop.permute.xlu0 %216
  %218 = vrot.lane.b32.xlu0 %v55, 50
  %v219 = vpop.permute.xlu0 %218
  %220 = vrot.lane.b32.xlu0 %v56, 50
  %v221 = vpop.permute.xlu0 %220
  %222 = vrot.lane.b32.xlu0 %v57, 50
  %v223 = vpop.permute.xlu0 %222
  %224 = vrot.lane.b32.xlu0 %v58, 50
  %v225 = vpop.permute.xlu0 %224
  %226 = vrot.lane.b32.xlu0 %v59, 50
  %v227 = vpop.permute.xlu0 %226
  %228 = vrot.lane.b32.xlu0 %v60, 50
  %v229 = vpop.permute.xlu0 %228
  %230 = vrot.lane.b32.xlu0 %v61, 50
  %v231 = vpop.permute.xlu0 %230
  %232 = vrot.lane.b32.xlu0 %v62, 50
  %v233 = vpop.permute.xlu0 %232
  %234 = vrot.lane.b32.xlu0 %v63, 50
  %v235 = vpop.permute.xlu0 %234
  %236 = vrot.lane.b32.xlu0 %v64, 50
  %v237 = vpop.permute.xlu0 %236
  %238 = vrot.lane.b32.xlu0 %v65, 50
  %v239 = vpop.permute.xlu0 %238
  %240 = vrot.lane.b32.xlu0 %v66, 50
  %v241 = vpop.permute.xlu0 %240
  %242 = vrot.lane.b32.xlu0 %v67, 50
  %v243 = vpop.permute.xlu0 %242
  %244 = vrot.lane.b32.xlu0 %v68, 50
  %v245 = vpop.permute.xlu0 %244
  %246 = vrot.lane.b32.xlu0 %v69, 50
  %v247 = vpop.permute.xlu0 %246
  %248 = vrot.lane.b32.xlu0 %v70, 50
  %v249 = vpop.permute.xlu0 %248
  %250 = vrot.lane.b32.xlu0 %v71, 50
  %v251 = vpop.permute.xlu0 %250
  %252 = vrot.lane.b32.xlu0 %v72, 50
  %v253 = vpop.permute.xlu0 %252
  %254 = vrot.lane.b32.xlu0 %v73, 50
  %v255 = vpop.permute.xlu0 %254
  %256 = vrot.lane.b32.xlu0 %v74, 50
  %v257 = vpop.permute.xlu0 %256
  %258 = vrot.lane.b32.xlu0 %v75, 50
  %v259 = vpop.permute.xlu0 %258
  %260 = vrot.lane.b32.xlu0 %v76, 50
  %v261 = vpop.permute.xlu0 %260
  %262 = vrot.lane.b32.xlu0 %v77, 50
  %v263 = vpop.permute.xlu0 %262
  %264 = vrot.lane.b32.xlu0 %v78, 50
  %v265 = vpop.permute.xlu0 %264
  %266 = vrot.lane.b32.xlu0 %v79, 50
  %v267 = vpop.permute.xlu0 %266
  %268 = vrot.lane.b32.xlu0 %v80, 50
  %v269 = vpop.permute.xlu0 %268
  %270 = vrot.lane.b32.xlu0 %v81, 50
  %v271 = vpop.permute.xlu0 %270
  %272 = vrot.lane.b32.xlu0 %v82, 50
  %v273 = vpop.permute.xlu0 %272
  %274 = vrot.lane.b32.xlu0 %v83, 50
  %v275 = vpop.permute.xlu0 %274
  %340 = vrot.lane.b32.xlu0 %v84, 2
  %v341 = vpop.permute.xlu0 %340
  %342 = vrot.lane.b32.xlu0 %v85, 2
  %v343 = vpop.permute.xlu0 %342
  %344 = vrot.lane.b32.xlu0 %v86, 2
  %v345 = vpop.permute.xlu0 %344
  %346 = vrot.lane.b32.xlu0 %v87, 2
  %v347 = vpop.permute.xlu0 %346
  %348 = vrot.lane.b32.xlu0 %v88, 2
  %v349 = vpop.permute.xlu0 %348
  %350 = vrot.lane.b32.xlu0 %v89, 2
  %v351 = vpop.permute.xlu0 %350
  %352 = vrot.lane.b32.xlu0 %v90, 2
  %v353 = vpop.permute.xlu0 %352
  %354 = vrot.lane.b32.xlu0 %v91, 2
  %v355 = vpop.permute.xlu0 %354
  %356 = vrot.lane.b32.xlu0 %v92, 2
  %v357 = vpop.permute.xlu0 %356
  %358 = vrot.lane.b32.xlu0 %v93, 2
  %v359 = vpop.permute.xlu0 %358
  %360 = vrot.lane.b32.xlu0 %v94, 2
  %v361 = vpop.permute.xlu0 %360
  %362 = vrot.lane.b32.xlu0 %v95, 2
  %v363 = vpop.permute.xlu0 %362
  %364 = vrot.lane.b32.xlu0 %v96, 2
  %v365 = vpop.permute.xlu0 %364
  %366 = vrot.lane.b32.xlu0 %v97, 2
  %v367 = vpop.permute.xlu0 %366
  %368 = vrot.lane.b32.xlu0 %v98, 2
  %v369 = vpop.permute.xlu0 %368
  %370 = vrot.lane.b32.xlu0 %v99, 2
  %v371 = vpop.permute.xlu0 %370
  %372 = vrot.lane.b32.xlu0 %v100, 2
  %v373 = vpop.permute.xlu0 %372
  %374 = vrot.lane.b32.xlu0 %v101, 2
  %v375 = vpop.permute.xlu0 %374
  %376 = vrot.lane.b32.xlu0 %v102, 2
  %v377 = vpop.permute.xlu0 %376
  %378 = vrot.lane.b32.xlu0 %v103, 2
  %v379 = vpop.permute.xlu0 %378
  %380 = vrot.lane.b32.xlu0 %v104, 2
  %v381 = vpop.permute.xlu0 %380
  %382 = vrot.lane.b32.xlu0 %v105, 2
  %v383 = vpop.permute.xlu0 %382
  %384 = vrot.lane.b32.xlu0 %v106, 2
  %v385 = vpop.permute.xlu0 %384
  %386 = vrot.lane.b32.xlu0 %v107, 2
  %v387 = vpop.permute.xlu0 %386
  %388 = vrot.lane.b32.xlu0 %v108, 2
  %v389 = vpop.permute.xlu0 %388
  %390 = vrot.lane.b32.xlu0 %v109, 2
  %v391 = vpop.permute.xlu0 %390
  %392 = vrot.lane.b32.xlu0 %v110, 2
  %v393 = vpop.permute.xlu0 %392
  %394 = vrot.lane.b32.xlu0 %v111, 2
  %v395 = vpop.permute.xlu0 %394
  %396 = vrot.lane.b32.xlu0 %v112, 2
  %v397 = vpop.permute.xlu0 %396
  %398 = vrot.lane.b32.xlu0 %v113, 2
  %v399 = vpop.permute.xlu0 %398
  %400 = vrot.lane.b32.xlu0 %v114, 2
  %v401 = vpop.permute.xlu0 %400
  %402 = vrot.lane.b32.xlu0 %v115, 2
  %v403 = vpop.permute.xlu0 %402
  %468 = vrot.lane.b32.xlu0 %v116, 92
  %v469 = vpop.permute.xlu0 %468
  %470 = vrot.lane.b32.xlu0 %v117, 92
  %v471 = vpop.permute.xlu0 %470
  %472 = vrot.lane.b32.xlu0 %v118, 92
  %v473 = vpop.permute.xlu0 %472
  %474 = vrot.lane.b32.xlu0 %v119, 92
  %v475 = vpop.permute.xlu0 %474
  %476 = vrot.lane.b32.xlu0 %v120, 92
  %v477 = vpop.permute.xlu0 %476
  %478 = vrot.lane.b32.xlu0 %v121, 92
  %v479 = vpop.permute.xlu0 %478
  %480 = vrot.lane.b32.xlu0 %v122, 92
  %v481 = vpop.permute.xlu0 %480
  %482 = vrot.lane.b32.xlu0 %v123, 92
  %v483 = vpop.permute.xlu0 %482
  %484 = vrot.lane.b32.xlu0 %v124, 92
  %v485 = vpop.permute.xlu0 %484
  %486 = vrot.lane.b32.xlu0 %v125, 92
  %v487 = vpop.permute.xlu0 %486
  %488 = vrot.lane.b32.xlu0 %v126, 92
  %v489 = vpop.permute.xlu0 %488
  %490 = vrot.lane.b32.xlu0 %v127, 92
  %v491 = vpop.permute.xlu0 %490
  %492 = vrot.lane.b32.xlu0 %v128, 92
  %v493 = vpop.permute.xlu0 %492
  %494 = vrot.lane.b32.xlu0 %v129, 92
  %v495 = vpop.permute.xlu0 %494
  %496 = vrot.lane.b32.xlu0 %v130, 92
  %v497 = vpop.permute.xlu0 %496
  %498 = vrot.lane.b32.xlu0 %v131, 92
  %v499 = vpop.permute.xlu0 %498
  %500 = vrot.lane.b32.xlu0 %v132, 92
  %v501 = vpop.permute.xlu0 %500
  %502 = vrot.lane.b32.xlu0 %v133, 92
  %v503 = vpop.permute.xlu0 %502
  %504 = vrot.lane.b32.xlu0 %v134, 92
  %v505 = vpop.permute.xlu0 %504
  %506 = vrot.lane.b32.xlu0 %v135, 92
  %v507 = vpop.permute.xlu0 %506
  %508 = vrot.lane.b32.xlu0 %v136, 92
  %v509 = vpop.permute.xlu0 %508
  %510 = vrot.lane.b32.xlu0 %v137, 92
  %v511 = vpop.permute.xlu0 %510
  %512 = vrot.lane.b32.xlu0 %v138, 92
  %v513 = vpop.permute.xlu0 %512
  %514 = vrot.lane.b32.xlu0 %v139, 92
  %v515 = vpop.permute.xlu0 %514
  %516 = vrot.lane.b32.xlu0 %v140, 92
  %v517 = vpop.permute.xlu0 %516
  %518 = vrot.lane.b32.xlu0 %v141, 92
  %v519 = vpop.permute.xlu0 %518
  %520 = vrot.lane.b32.xlu0 %v142, 92
  %v521 = vpop.permute.xlu0 %520
  %522 = vrot.lane.b32.xlu0 %v143, 92
  %v523 = vpop.permute.xlu0 %522
  %524 = vrot.lane.b32.xlu0 %v144, 92
  %v525 = vpop.permute.xlu0 %524
  %526 = vrot.lane.b32.xlu0 %v145, 92
  %v527 = vpop.permute.xlu0 %526
  %528 = vrot.lane.b32.xlu0 %v146, 92
  %v529 = vpop.permute.xlu0 %528
  %530 = vrot.lane.b32.xlu0 %v147, 92
  %v531 = vpop.permute.xlu0 %530
  %596 = vrot.lane.b32.xlu0 %v148, 97
  %v597 = vpop.permute.xlu0 %596
  %598 = vrot.lane.b32.xlu0 %v149, 97
  %v599 = vpop.permute.xlu0 %598
  %600 = vrot.lane.b32.xlu0 %v150, 97
  %v601 = vpop.permute.xlu0 %600
  %602 = vrot.lane.b32.xlu0 %v151, 97
  %v603 = vpop.permute.xlu0 %602
  %604 = vrot.lane.b32.xlu0 %v152, 97
  %v605 = vpop.permute.xlu0 %604
  %606 = vrot.lane.b32.xlu0 %v153, 97
  %v607 = vpop.permute.xlu0 %606
  %608 = vrot.lane.b32.xlu0 %v154, 97
  %v609 = vpop.permute.xlu0 %608
  %610 = vrot.lane.b32.xlu0 %v155, 97
  %v611 = vpop.permute.xlu0 %610
  %612 = vrot.lane.b32.xlu0 %v156, 97
  %v613 = vpop.permute.xlu0 %612
  %614 = vrot.lane.b32.xlu0 %v157, 97
  %v615 = vpop.permute.xlu0 %614
  %616 = vrot.lane.b32.xlu0 %v158, 97
  %v617 = vpop.permute.xlu0 %616
  %618 = vrot.lane.b32.xlu0 %v159, 97
  %v619 = vpop.permute.xlu0 %618
  %620 = vrot.lane.b32.xlu0 %v160, 97
  %v621 = vpop.permute.xlu0 %620
  %622 = vrot.lane.b32.xlu0 %v161, 97
  %v623 = vpop.permute.xlu0 %622
  %624 = vrot.lane.b32.xlu0 %v162, 97
  %v625 = vpop.permute.xlu0 %624
  %626 = vrot.lane.b32.xlu0 %v163, 97
  %v627 = vpop.permute.xlu0 %626
  %628 = vrot.lane.b32.xlu0 %v164, 97
  %v629 = vpop.permute.xlu0 %628
  %630 = vrot.lane.b32.xlu0 %v165, 97
  %v631 = vpop.permute.xlu0 %630
  %632 = vrot.lane.b32.xlu0 %v166, 97
  %v633 = vpop.permute.xlu0 %632
  %634 = vrot.lane.b32.xlu0 %v167, 97
  %v635 = vpop.permute.xlu0 %634
  %636 = vrot.lane.b32.xlu0 %v168, 97
  %v637 = vpop.permute.xlu0 %636
  %638 = vrot.lane.b32.xlu0 %v169, 97
  %v639 = vpop.permute.xlu0 %638
  %640 = vrot.lane.b32.xlu0 %v170, 97
  %v641 = vpop.permute.xlu0 %640
  %642 = vrot.lane.b32.xlu0 %v171, 97
  %v643 = vpop.permute.xlu0 %642
  %644 = vrot.lane.b32.xlu0 %v172, 97
  %v645 = vpop.permute.xlu0 %644
  %646 = vrot.lane.b32.xlu0 %v173, 97
  %v647 = vpop.permute.xlu0 %646
  %648 = vrot.lane.b32.xlu0 %v174, 97
  %v649 = vpop.permute.xlu0 %648
  %650 = vrot.lane.b32.xlu0 %v175, 97
  %v651 = vpop.permute.xlu0 %650
  %652 = vrot.lane.b32.xlu0 %v176, 97
  %v653 = vpop.permute.xlu0 %652
  %654 = vrot.lane.b32.xlu0 %v177, 97
  %v655 = vpop.permute.xlu0 %654
  %656 = vrot.lane.b32.xlu0 %v178, 97
  %v657 = vpop.permute.xlu0 %656
  %658 = vrot.lane.b32.xlu0 %v179, 97
  %v659 = vpop.permute.xlu0 %658
  %724 = vrot.lane.b32.xlu0 %v20, 117
  %v725 = vpop.permute.xlu0 %724
  %726 = vrot.lane.b32.xlu0 %v21, 117
  %v727 = vpop.permute.xlu0 %726
  %728 = vrot.lane.b32.xlu0 %v22, 117
  %v729 = vpop.permute.xlu0 %728
  %730 = vrot.lane.b32.xlu0 %v23, 117
  %v731 = vpop.permute.xlu0 %730
  %732 = vrot.lane.b32.xlu0 %v24, 117
  %v733 = vpop.permute.xlu0 %732
  %734 = vrot.lane.b32.xlu0 %v25, 117
  %v735 = vpop.permute.xlu0 %734
  %736 = vrot.lane.b32.xlu0 %v26, 117
  %v737 = vpop.permute.xlu0 %736
  %738 = vrot.lane.b32.xlu0 %v27, 117
  %v739 = vpop.permute.xlu0 %738
  %740 = vrot.lane.b32.xlu0 %v28, 117
  %v741 = vpop.permute.xlu0 %740
  %742 = vrot.lane.b32.xlu0 %v29, 117
  %v743 = vpop.permute.xlu0 %742
  %744 = vrot.lane.b32.xlu0 %v30, 117
  %v745 = vpop.permute.xlu0 %744
  %746 = vrot.lane.b32.xlu0 %v31, 117
  %v747 = vpop.permute.xlu0 %746
  %748 = vrot.lane.b32.xlu0 %v32, 117
  %v749 = vpop.permute.xlu0 %748
  %750 = vrot.lane.b32.xlu0 %v33, 117
  %v751 = vpop.permute.xlu0 %750
  %752 = vrot.lane.b32.xlu0 %v34, 117
  %v753 = vpop.permute.xlu0 %752
  %754 = vrot.lane.b32.xlu0 %v35, 117
  %v755 = vpop.permute.xlu0 %754
  %756 = vrot.lane.b32.xlu0 %v36, 117
  %v757 = vpop.permute.xlu0 %756
  %758 = vrot.lane.b32.xlu0 %v37, 117
  %v759 = vpop.permute.xlu0 %758
  %760 = vrot.lane.b32.xlu0 %v38, 117
  %v761 = vpop.permute.xlu0 %760
  %762 = vrot.lane.b32.xlu0 %v39, 117
  %v763 = vpop.permute.xlu0 %762
  %764 = vrot.lane.b32.xlu0 %v40, 117
  %v765 = vpop.permute.xlu0 %764
  %766 = vrot.lane.b32.xlu0 %v41, 117
  %v767 = vpop.permute.xlu0 %766
  %768 = vrot.lane.b32.xlu0 %v42, 117
  %v769 = vpop.permute.xlu0 %768
  %770 = vrot.lane.b32.xlu0 %v43, 117
  %v771 = vpop.permute.xlu0 %770
  %772 = vrot.lane.b32.xlu0 %v44, 117
  %v773 = vpop.permute.xlu0 %772
  %774 = vrot.lane.b32.xlu0 %v45, 117
  %v775 = vpop.permute.xlu0 %774
  %776 = vrot.lane.b32.xlu0 %v46, 117
  %v777 = vpop.permute.xlu0 %776
  %778 = vrot.lane.b32.xlu0 %v47, 117
  %v779 = vpop.permute.xlu0 %778
  %780 = vrot.lane.b32.xlu0 %v48, 117
  %v781 = vpop.permute.xlu0 %780
  %782 = vrot.lane.b32.xlu0 %v49, 117
  %v783 = vpop.permute.xlu0 %782
  %784 = vrot.lane.b32.xlu0 %v50, 117
  %v785 = vpop.permute.xlu0 %784
  %786 = vrot.lane.b32.xlu0 %v51, 117
  %v787 = vpop.permute.xlu0 %786
  %820 = vrot.lane.b32.xlu0 %v52, 39
  %v821 = vpop.permute.xlu0 %820
  %822 = vrot.lane.b32.xlu0 %v53, 39
  %v823 = vpop.permute.xlu0 %822
  %824 = vrot.lane.b32.xlu0 %v54, 39
  %v825 = vpop.permute.xlu0 %824
  %826 = vrot.lane.b32.xlu0 %v55, 39
  %v827 = vpop.permute.xlu0 %826
  %828 = vrot.lane.b32.xlu0 %v56, 39
  %v829 = vpop.permute.xlu0 %828
  %830 = vrot.lane.b32.xlu0 %v57, 39
  %v831 = vpop.permute.xlu0 %830
  %832 = vrot.lane.b32.xlu0 %v58, 39
  %v833 = vpop.permute.xlu0 %832
  %834 = vrot.lane.b32.xlu0 %v59, 39
  %v835 = vpop.permute.xlu0 %834
  %836 = vrot.lane.b32.xlu0 %v60, 39
  %v837 = vpop.permute.xlu0 %836
  %838 = vrot.lane.b32.xlu0 %v61, 39
  %v839 = vpop.permute.xlu0 %838
  %840 = vrot.lane.b32.xlu0 %v62, 39
  %v841 = vpop.permute.xlu0 %840
  %842 = vrot.lane.b32.xlu0 %v63, 39
  %v843 = vpop.permute.xlu0 %842
  %844 = vrot.lane.b32.xlu0 %v64, 39
  %v845 = vpop.permute.xlu0 %844
  %846 = vrot.lane.b32.xlu0 %v65, 39
  %v847 = vpop.permute.xlu0 %846
  %848 = vrot.lane.b32.xlu0 %v66, 39
  %v849 = vpop.permute.xlu0 %848
  %850 = vrot.lane.b32.xlu0 %v67, 39
  %v851 = vpop.permute.xlu0 %850
  %852 = vrot.lane.b32.xlu0 %v68, 39
  %v853 = vpop.permute.xlu0 %852
  %854 = vrot.lane.b32.xlu0 %v69, 39
  %v855 = vpop.permute.xlu0 %854
  %856 = vrot.lane.b32.xlu0 %v70, 39
  %v857 = vpop.permute.xlu0 %856
  %858 = vrot.lane.b32.xlu0 %v71, 39
  %v859 = vpop.permute.xlu0 %858
  %860 = vrot.lane.b32.xlu0 %v72, 39
  %v861 = vpop.permute.xlu0 %860
  %862 = vrot.lane.b32.xlu0 %v73, 39
  %v863 = vpop.permute.xlu0 %862
  %864 = vrot.lane.b32.xlu0 %v74, 39
  %v865 = vpop.permute.xlu0 %864
  %866 = vrot.lane.b32.xlu0 %v75, 39
  %v867 = vpop.permute.xlu0 %866
  %868 = vrot.lane.b32.xlu0 %v76, 39
  %v869 = vpop.permute.xlu0 %868
  %870 = vrot.lane.b32.xlu0 %v77, 39
  %v871 = vpop.permute.xlu0 %870
  %872 = vrot.lane.b32.xlu0 %v78, 39
  %v873 = vpop.permute.xlu0 %872
  %874 = vrot.lane.b32.xlu0 %v79, 39
  %v875 = vpop.permute.xlu0 %874
  %876 = vrot.lane.b32.xlu0 %v80, 39
  %v877 = vpop.permute.xlu0 %876
  %878 = vrot.lane.b32.xlu0 %v81, 39
  %v879 = vpop.permute.xlu0 %878
  %880 = vrot.lane.b32.xlu0 %v82, 39
  %v881 = vpop.permute.xlu0 %880
  %882 = vrot.lane.b32.xlu0 %v83, 39
  %v883 = vpop.permute.xlu0 %882
  %916 = vrot.lane.b32.xlu0 %v84, 119
  %v917 = vpop.permute.xlu0 %916
  %918 = vrot.lane.b32.xlu0 %v85, 119
  %v919 = vpop.permute.xlu0 %918
  %920 = vrot.lane.b32.xlu0 %v86, 119
  %v921 = vpop.permute.xlu0 %920
  %922 = vrot.lane.b32.xlu0 %v87, 119
  %v923 = vpop.permute.xlu0 %922
  %924 = vrot.lane.b32.xlu0 %v88, 119
  %v925 = vpop.permute.xlu0 %924
  %926 = vrot.lane.b32.xlu0 %v89, 119
  %v927 = vpop.permute.xlu0 %926
  %928 = vrot.lane.b32.xlu0 %v90, 119
  %v929 = vpop.permute.xlu0 %928
  %930 = vrot.lane.b32.xlu0 %v91, 119
  %v931 = vpop.permute.xlu0 %930
  %932 = vrot.lane.b32.xlu0 %v92, 119
  %v933 = vpop.permute.xlu0 %932
  %934 = vrot.lane.b32.xlu0 %v93, 119
  %v935 = vpop.permute.xlu0 %934
  %936 = vrot.lane.b32.xlu0 %v94, 119
  %v937 = vpop.permute.xlu0 %936
  %938 = vrot.lane.b32.xlu0 %v95, 119
  %v939 = vpop.permute.xlu0 %938
  %940 = vrot.lane.b32.xlu0 %v96, 119
  %v941 = vpop.permute.xlu0 %940
  %942 = vrot.lane.b32.xlu0 %v97, 119
  %v943 = vpop.permute.xlu0 %942
  %944 = vrot.lane.b32.xlu0 %v98, 119
  %v945 = vpop.permute.xlu0 %944
  %946 = vrot.lane.b32.xlu0 %v99, 119
  %v947 = vpop.permute.xlu0 %946
  %948 = vrot.lane.b32.xlu0 %v100, 119
  %v949 = vpop.permute.xlu0 %948
  %950 = vrot.lane.b32.xlu0 %v101, 119
  %v951 = vpop.permute.xlu0 %950
  %952 = vrot.lane.b32.xlu0 %v102, 119
  %v953 = vpop.permute.xlu0 %952
  %954 = vrot.lane.b32.xlu0 %v103, 119
  %v955 = vpop.permute.xlu0 %954
  %956 = vrot.lane.b32.xlu0 %v104, 119
  %v957 = vpop.permute.xlu0 %956
  %958 = vrot.lane.b32.xlu0 %v105, 119
  %v959 = vpop.permute.xlu0 %958
  %960 = vrot.lane.b32.xlu0 %v106, 119
  %v961 = vpop.permute.xlu0 %960
  %962 = vrot.lane.b32.xlu0 %v107, 119
  %v963 = vpop.permute.xlu0 %962
  %964 = vrot.lane.b32.xlu0 %v108, 119
  %v965 = vpop.permute.xlu0 %964
  %966 = vrot.lane.b32.xlu0 %v109, 119
  %v967 = vpop.permute.xlu0 %966
  %968 = vrot.lane.b32.xlu0 %v110, 119
  %v969 = vpop.permute.xlu0 %968
  %970 = vrot.lane.b32.xlu0 %v111, 119
  %v971 = vpop.permute.xlu0 %970
  %972 = vrot.lane.b32.xlu0 %v112, 119
  %v973 = vpop.permute.xlu0 %972
  %974 = vrot.lane.b32.xlu0 %v113, 119
  %v975 = vpop.permute.xlu0 %974
  %976 = vrot.lane.b32.xlu0 %v114, 119
  %v977 = vpop.permute.xlu0 %976
  %978 = vrot.lane.b32.xlu0 %v115, 119
  %v979 = vpop.permute.xlu0 %978
  %1012 = vrot.lane.b32.xlu0 %v116, 81
  %v1013 = vpop.permute.xlu0 %1012
  %1014 = vrot.lane.b32.xlu0 %v117, 81
  %v1015 = vpop.permute.xlu0 %1014
  %1016 = vrot.lane.b32.xlu0 %v118, 81
  %v1017 = vpop.permute.xlu0 %1016
  %1018 = vrot.lane.b32.xlu0 %v119, 81
  %v1019 = vpop.permute.xlu0 %1018
  %1020 = vrot.lane.b32.xlu0 %v120, 81
  %v1021 = vpop.permute.xlu0 %1020
  %1022 = vrot.lane.b32.xlu0 %v121, 81
  %v1023 = vpop.permute.xlu0 %1022
  %1024 = vrot.lane.b32.xlu0 %v122, 81
  %v1025 = vpop.permute.xlu0 %1024
  %1026 = vrot.lane.b32.xlu0 %v123, 81
  %v1027 = vpop.permute.xlu0 %1026
  %1028 = vrot.lane.b32.xlu0 %v124, 81
  %v1029 = vpop.permute.xlu0 %1028
  %1030 = vrot.lane.b32.xlu0 %v125, 81
  %v1031 = vpop.permute.xlu0 %1030
  %1032 = vrot.lane.b32.xlu0 %v126, 81
  %v1033 = vpop.permute.xlu0 %1032
  %1034 = vrot.lane.b32.xlu0 %v127, 81
  %v1035 = vpop.permute.xlu0 %1034
  %1036 = vrot.lane.b32.xlu0 %v128, 81
  %v1037 = vpop.permute.xlu0 %1036
  %1038 = vrot.lane.b32.xlu0 %v129, 81
  %v1039 = vpop.permute.xlu0 %1038
  %1040 = vrot.lane.b32.xlu0 %v130, 81
  %v1041 = vpop.permute.xlu0 %1040
  %1042 = vrot.lane.b32.xlu0 %v131, 81
  %v1043 = vpop.permute.xlu0 %1042
  %1044 = vrot.lane.b32.xlu0 %v132, 81
  %v1045 = vpop.permute.xlu0 %1044
  %1046 = vrot.lane.b32.xlu0 %v133, 81
  %v1047 = vpop.permute.xlu0 %1046
  %1048 = vrot.lane.b32.xlu0 %v134, 81
  %v1049 = vpop.permute.xlu0 %1048
  %1050 = vrot.lane.b32.xlu0 %v135, 81
  %v1051 = vpop.permute.xlu0 %1050
  %1052 = vrot.lane.b32.xlu0 %v136, 81
  %v1053 = vpop.permute.xlu0 %1052
  %1054 = vrot.lane.b32.xlu0 %v137, 81
  %v1055 = vpop.permute.xlu0 %1054
  %1056 = vrot.lane.b32.xlu0 %v138, 81
  %v1057 = vpop.permute.xlu0 %1056
  %1058 = vrot.lane.b32.xlu0 %v139, 81
  %v1059 = vpop.permute.xlu0 %1058
  %1060 = vrot.lane.b32.xlu0 %v140, 81
  %v1061 = vpop.permute.xlu0 %1060
  %1062 = vrot.lane.b32.xlu0 %v141, 81
  %v1063 = vpop.permute.xlu0 %1062
  %1064 = vrot.lane.b32.xlu0 %v142, 81
  %v1065 = vpop.permute.xlu0 %1064
  %1066 = vrot.lane.b32.xlu0 %v143, 81
  %v1067 = vpop.permute.xlu0 %1066
  %1068 = vrot.lane.b32.xlu0 %v144, 81
  %v1069 = vpop.permute.xlu0 %1068
  %1070 = vrot.lane.b32.xlu0 %v145, 81
  %v1071 = vpop.permute.xlu0 %1070
  %1072 = vrot.lane.b32.xlu0 %v146, 81
  %v1073 = vpop.permute.xlu0 %1072
  %1074 = vrot.lane.b32.xlu0 %v147, 81
  %v1075 = vpop.permute.xlu0 %1074
  %1108 = vrot.lane.b32.xlu0 %v148, 86
  %v1109 = vpop.permute.xlu0 %1108
  %1110 = vrot.lane.b32.xlu0 %v149, 86
  %v1111 = vpop.permute.xlu0 %1110
  %1112 = vrot.lane.b32.xlu0 %v150, 86
  %v1113 = vpop.permute.xlu0 %1112
  %1114 = vrot.lane.b32.xlu0 %v151, 86
  %v1115 = vpop.permute.xlu0 %1114
  %1116 = vrot.lane.b32.xlu0 %v152, 86
  %v1117 = vpop.permute.xlu0 %1116
  %1118 = vrot.lane.b32.xlu0 %v153, 86
  %v1119 = vpop.permute.xlu0 %1118
  %1120 = vrot.lane.b32.xlu0 %v154, 86
  %v1121 = vpop.permute.xlu0 %1120
  %1122 = vrot.lane.b32.xlu0 %v155, 86
  %v1123 = vpop.permute.xlu0 %1122
  %1124 = vrot.lane.b32.xlu0 %v156, 86
  %v1125 = vpop.permute.xlu0 %1124
  %1126 = vrot.lane.b32.xlu0 %v157, 86
  %v1127 = vpop.permute.xlu0 %1126
  %1128 = vrot.lane.b32.xlu0 %v158, 86
  %v1129 = vpop.permute.xlu0 %1128
  %1130 = vrot.lane.b32.xlu0 %v159, 86
  %v1131 = vpop.permute.xlu0 %1130
  %1132 = vrot.lane.b32.xlu0 %v160, 86
  %v1133 = vpop.permute.xlu0 %1132
  %1134 = vrot.lane.b32.xlu0 %v161, 86
  %v1135 = vpop.permute.xlu0 %1134
  %1136 = vrot.lane.b32.xlu0 %v162, 86
  %v1137 = vpop.permute.xlu0 %1136
  %1138 = vrot.lane.b32.xlu0 %v163, 86
  %v1139 = vpop.permute.xlu0 %1138
  %1140 = vrot.lane.b32.xlu0 %v164, 86
  %v1141 = vpop.permute.xlu0 %1140
  %1142 = vrot.lane.b32.xlu0 %v165, 86
  %v1143 = vpop.permute.xlu0 %1142
  %1144 = vrot.lane.b32.xlu0 %v166, 86
  %v1145 = vpop.permute.xlu0 %1144
  %1146 = vrot.lane.b32.xlu0 %v167, 86
  %v1147 = vpop.permute.xlu0 %1146
  %1148 = vrot.lane.b32.xlu0 %v168, 86
  %v1149 = vpop.permute.xlu0 %1148
  %1150 = vrot.lane.b32.xlu0 %v169, 86
  %v1151 = vpop.permute.xlu0 %1150
  %1152 = vrot.lane.b32.xlu0 %v170, 86
  %v1153 = vpop.permute.xlu0 %1152
  %1154 = vrot.lane.b32.xlu0 %v171, 86
  %v1155 = vpop.permute.xlu0 %1154
  %1156 = vrot.lane.b32.xlu0 %v172, 86
  %v1157 = vpop.permute.xlu0 %1156
  %1158 = vrot.lane.b32.xlu0 %v173, 86
  %v1159 = vpop.permute.xlu0 %1158
  %1160 = vrot.lane.b32.xlu0 %v174, 86
  %v1161 = vpop.permute.xlu0 %1160
  %1162 = vrot.lane.b32.xlu0 %v175, 86
  %v1163 = vpop.permute.xlu0 %1162
  %1164 = vrot.lane.b32.xlu0 %v176, 86
  %v1165 = vpop.permute.xlu0 %1164
  %1166 = vrot.lane.b32.xlu0 %v177, 86
  %v1167 = vpop.permute.xlu0 %1166
  %1168 = vrot.lane.b32.xlu0 %v178, 86
  %v1169 = vpop.permute.xlu0 %1168
  %1170 = vrot.lane.b32.xlu0 %v179, 86
  %v1171 = vpop.permute.xlu0 %1170
  %vm1204 = vcmask 408576
  %v1205 = vsel %vm1204, %v20, %v213
  %v1206 = vsel %vm1204, %v21, %v215
  %v1207 = vsel %vm1204, %v22, %v217
  %v1208 = vsel %vm1204, %v23, %v219
  %v1209 = vsel %vm1204, %v24, %v221
  %v1210 = vsel %vm1204, %v25, %v223
  %v1211 = vsel %vm1204, %v26, %v225
  %v1212 = vsel %vm1204, %v27, %v227
  %v1213 = vsel %vm1204, %v28, %v229
  %v1214 = vsel %vm1204, %v29, %v231
  %v1215 = vsel %vm1204, %v30, %v233
  %v1216 = vsel %vm1204, %v31, %v235
  %v1217 = vsel %vm1204, %v32, %v237
  %v1218 = vsel %vm1204, %v33, %v239
  %v1219 = vsel %vm1204, %v34, %v241
  %v1220 = vsel %vm1204, %v35, %v243
  %v1221 = vsel %vm1204, %v36, %v245
  %v1222 = vsel %vm1204, %v37, %v247
  %v1223 = vsel %vm1204, %v38, %v249
  %v1224 = vsel %vm1204, %v39, %v251
  %v1225 = vsel %vm1204, %v40, %v253
  %v1226 = vsel %vm1204, %v41, %v255
  %v1227 = vsel %vm1204, %v42, %v257
  %v1228 = vsel %vm1204, %v43, %v259
  %v1229 = vsel %vm1204, %v44, %v261
  %v1230 = vsel %vm1204, %v45, %v263
  %v1231 = vsel %vm1204, %v46, %v265
  %v1232 = vsel %vm1204, %v47, %v267
  %v1233 = vsel %vm1204, %v48, %v269
  %v1234 = vsel %vm1204, %v49, %v271
  %v1235 = vsel %vm1204, %v50, %v273
  %v1236 = vsel %vm1204, %v51, %v275
  %vm1237 = vcmask 15360
  %v1238 = vsel %vm1237, %v213, %v341
  %v1239 = vsel %vm1237, %v215, %v343
  %v1240 = vsel %vm1237, %v217, %v345
  %v1241 = vsel %vm1237, %v219, %v347
  %v1242 = vsel %vm1237, %v221, %v349
  %v1243 = vsel %vm1237, %v223, %v351
  %v1244 = vsel %vm1237, %v225, %v353
  %v1245 = vsel %vm1237, %v227, %v355
  %v1246 = vsel %vm1237, %v229, %v357
  %v1247 = vsel %vm1237, %v231, %v359
  %v1248 = vsel %vm1237, %v233, %v361
  %v1249 = vsel %vm1237, %v235, %v363
  %v1250 = vsel %vm1237, %v237, %v365
  %v1251 = vsel %vm1237, %v239, %v367
  %v1252 = vsel %vm1237, %v241, %v369
  %v1253 = vsel %vm1237, %v243, %v371
  %v1254 = vsel %vm1237, %v245, %v373
  %v1255 = vsel %vm1237, %v247, %v375
  %v1256 = vsel %vm1237, %v249, %v377
  %v1257 = vsel %vm1237, %v251, %v379
  %v1258 = vsel %vm1237, %v253, %v381
  %v1259 = vsel %vm1237, %v255, %v383
  %v1260 = vsel %vm1237, %v257, %v385
  %v1261 = vsel %vm1237, %v259, %v387
  %v1262 = vsel %vm1237, %v261, %v389
  %v1263 = vsel %vm1237, %v263, %v391
  %v1264 = vsel %vm1237, %v265, %v393
  %v1265 = vsel %vm1237, %v267, %v395
  %v1266 = vsel %vm1237, %v269, %v397
  %v1267 = vsel %vm1237, %v271, %v399
  %v1268 = vsel %vm1237, %v273, %v401
  %v1269 = vsel %vm1237, %v275, %v403
  %vm1270 = vcmask 752640
  %v1271 = vsel %vm1270, %v1238, %v469
  %v1272 = vsel %vm1270, %v1239, %v471
  %v1273 = vsel %vm1270, %v1240, %v473
  %v1274 = vsel %vm1270, %v1241, %v475
  %v1275 = vsel %vm1270, %v1242, %v477
  %v1276 = vsel %vm1270, %v1243, %v479
  %v1277 = vsel %vm1270, %v1244, %v481
  %v1278 = vsel %vm1270, %v1245, %v483
  %v1279 = vsel %vm1270, %v1246, %v485
  %v1280 = vsel %vm1270, %v1247, %v487
  %v1281 = vsel %vm1270, %v1248, %v489
  %v1282 = vsel %vm1270, %v1249, %v491
  %v1283 = vsel %vm1270, %v1250, %v493
  %v1284 = vsel %vm1270, %v1251, %v495
  %v1285 = vsel %vm1270, %v1252, %v497
  %v1286 = vsel %vm1270, %v1253, %v499
  %v1287 = vsel %vm1270, %v1254, %v501
  %v1288 = vsel %vm1270, %v1255, %v503
  %v1289 = vsel %vm1270, %v1256, %v505
  %v1290 = vsel %vm1270, %v1257, %v507
  %v1291 = vsel %vm1270, %v1258, %v509
  %v1292 = vsel %vm1270, %v1259, %v511
  %v1293 = vsel %vm1270, %v1260, %v513
  %v1294 = vsel %vm1270, %v1261, %v515
  %v1295 = vsel %vm1270, %v1262, %v517
  %v1296 = vsel %vm1270, %v1263, %v519
  %v1297 = vsel %vm1270, %v1264, %v521
  %v1298 = vsel %vm1270, %v1265, %v523
  %v1299 = vsel %vm1270, %v1266, %v525
  %v1300 = vsel %vm1270, %v1267, %v527
  %v1301 = vsel %vm1270, %v1268, %v529
  %v1302 = vsel %vm1270, %v1269, %v531
  %vm1303 = vcmask 793600
  %v1304 = vsel %vm1303, %v1271, %v597
  %v1305 = vsel %vm1303, %v1272, %v599
  %v1306 = vsel %vm1303, %v1273, %v601
  %v1307 = vsel %vm1303, %v1274, %v603
  %v1308 = vsel %vm1303, %v1275, %v605
  %v1309 = vsel %vm1303, %v1276, %v607
  %v1310 = vsel %vm1303, %v1277, %v609
  %v1311 = vsel %vm1303, %v1278, %v611
  %v1312 = vsel %vm1303, %v1279, %v613
  %v1313 = vsel %vm1303, %v1280, %v615
  %v1314 = vsel %vm1303, %v1281, %v617
  %v1315 = vsel %vm1303, %v1282, %v619
  %v1316 = vsel %vm1303, %v1283, %v621
  %v1317 = vsel %vm1303, %v1284, %v623
  %v1318 = vsel %vm1303, %v1285, %v625
  %v1319 = vsel %vm1303, %v1286, %v627
  %v1320 = vsel %vm1303, %v1287, %v629
  %v1321 = vsel %vm1303, %v1288, %v631
  %v1322 = vsel %vm1303, %v1289, %v633
  %v1323 = vsel %vm1303, %v1290, %v635
  %v1324 = vsel %vm1303, %v1291, %v637
  %v1325 = vsel %vm1303, %v1292, %v639
  %v1326 = vsel %vm1303, %v1293, %v641
  %v1327 = vsel %vm1303, %v1294, %v643
  %v1328 = vsel %vm1303, %v1295, %v645
  %v1329 = vsel %vm1303, %v1296, %v647
  %v1330 = vsel %vm1303, %v1297, %v649
  %v1331 = vsel %vm1303, %v1298, %v651
  %v1332 = vsel %vm1303, %v1299, %v653
  %v1333 = vsel %vm1303, %v1300, %v655
  %v1334 = vsel %vm1303, %v1301, %v657
  %v1335 = vsel %vm1303, %v1302, %v659
  %vm1336 = vcmask 957440
  %v1337 = vsel %vm1336, %v1304, %v725
  %v1338 = vsel %vm1336, %v1305, %v727
  %v1339 = vsel %vm1336, %v1306, %v729
  %v1340 = vsel %vm1336, %v1307, %v731
  %v1341 = vsel %vm1336, %v1308, %v733
  %v1342 = vsel %vm1336, %v1309, %v735
  %v1343 = vsel %vm1336, %v1310, %v737
  %v1344 = vsel %vm1336, %v1311, %v739
  %v1345 = vsel %vm1336, %v1312, %v741
  %v1346 = vsel %vm1336, %v1313, %v743
  %v1347 = vsel %vm1336, %v1314, %v745
  %v1348 = vsel %vm1336, %v1315, %v747
  %v1349 = vsel %vm1336, %v1316, %v749
  %v1350 = vsel %vm1336, %v1317, %v751
  %v1351 = vsel %vm1336, %v1318, %v753
  %v1352 = vsel %vm1336, %v1319, %v755
  %v1353 = vsel %vm1336, %v1320, %v757
  %v1354 = vsel %vm1336, %v1321, %v759
  %v1355 = vsel %vm1336, %v1322, %v761
  %v1356 = vsel %vm1336, %v1323, %v763
  %v1357 = vsel %vm1336, %v1324, %v765
  %v1358 = vsel %vm1336, %v1325, %v767
  %v1359 = vsel %vm1336, %v1326, %v769
  %v1360 = vsel %vm1336, %v1327, %v771
  %v1361 = vsel %vm1336, %v1328, %v773
  %v1362 = vsel %vm1336, %v1329, %v775
  %v1363 = vsel %vm1336, %v1330, %v777
  %v1364 = vsel %vm1336, %v1331, %v779
  %v1365 = vsel %vm1336, %v1332, %v781
  %v1366 = vsel %vm1336, %v1333, %v783
  %v1367 = vsel %vm1336, %v1334, %v785
  %v1368 = vsel %vm1336, %v1335, %v787
  %vm1369 = vcmask 318464
  %v1370 = vsel %vm1369, %v725, %v821
  %v1371 = vsel %vm1369, %v727, %v823
  %v1372 = vsel %vm1369, %v729, %v825
  %v1373 = vsel %vm1369, %v731, %v827
  %v1374 = vsel %vm1369, %v733, %v829
  %v1375 = vsel %vm1369, %v735, %v831
  %v1376 = vsel %vm1369, %v737, %v833
  %v1377 = vsel %vm1369, %v739, %v835
  %v1378 = vsel %vm1369, %v741, %v837
  %v1379 = vsel %vm1369, %v743, %v839
  %v1380 = vsel %vm1369, %v745, %v841
  %v1381 = vsel %vm1369, %v747, %v843
  %v1382 = vsel %vm1369, %v749, %v845
  %v1383 = vsel %vm1369, %v751, %v847
  %v1384 = vsel %vm1369, %v753, %v849
  %v1385 = vsel %vm1369, %v755, %v851
  %v1386 = vsel %vm1369, %v757, %v853
  %v1387 = vsel %vm1369, %v759, %v855
  %v1388 = vsel %vm1369, %v761, %v857
  %v1389 = vsel %vm1369, %v763, %v859
  %v1390 = vsel %vm1369, %v765, %v861
  %v1391 = vsel %vm1369, %v767, %v863
  %v1392 = vsel %vm1369, %v769, %v865
  %v1393 = vsel %vm1369, %v771, %v867
  %v1394 = vsel %vm1369, %v773, %v869
  %v1395 = vsel %vm1369, %v775, %v871
  %v1396 = vsel %vm1369, %v777, %v873
  %v1397 = vsel %vm1369, %v779, %v875
  %v1398 = vsel %vm1369, %v781, %v877
  %v1399 = vsel %vm1369, %v783, %v879
  %v1400 = vsel %vm1369, %v785, %v881
  %v1401 = vsel %vm1369, %v787, %v883
  %vm1402 = vcmask 973824
  %v1403 = vsel %vm1402, %v1370, %v917
  %v1404 = vsel %vm1402, %v1371, %v919
  %v1405 = vsel %vm1402, %v1372, %v921
  %v1406 = vsel %vm1402, %v1373, %v923
  %v1407 = vsel %vm1402, %v1374, %v925
  %v1408 = vsel %vm1402, %v1375, %v927
  %v1409 = vsel %vm1402, %v1376, %v929
  %v1410 = vsel %vm1402, %v1377, %v931
  %v1411 = vsel %vm1402, %v1378, %v933
  %v1412 = vsel %vm1402, %v1379, %v935
  %v1413 = vsel %vm1402, %v1380, %v937
  %v1414 = vsel %vm1402, %v1381, %v939
  %v1415 = vsel %vm1402, %v1382, %v941
  %v1416 = vsel %vm1402, %v1383, %v943
  %v1417 = vsel %vm1402, %v1384, %v945
  %v1418 = vsel %vm1402, %v1385, %v947
  %v1419 = vsel %vm1402, %v1386, %v949
  %v1420 = vsel %vm1402, %v1387, %v951
  %v1421 = vsel %vm1402, %v1388, %v953
  %v1422 = vsel %vm1402, %v1389, %v955
  %v1423 = vsel %vm1402, %v1390, %v957
  %v1424 = vsel %vm1402, %v1391, %v959
  %v1425 = vsel %vm1402, %v1392, %v961
  %v1426 = vsel %vm1402, %v1393, %v963
  %v1427 = vsel %vm1402, %v1394, %v965
  %v1428 = vsel %vm1402, %v1395, %v967
  %v1429 = vsel %vm1402, %v1396, %v969
  %v1430 = vsel %vm1402, %v1397, %v971
  %v1431 = vsel %vm1402, %v1398, %v973
  %v1432 = vsel %vm1402, %v1399, %v975
  %v1433 = vsel %vm1402, %v1400, %v977
  %v1434 = vsel %vm1402, %v1401, %v979
  %vm1435 = vcmask 662528
  %v1436 = vsel %vm1435, %v917, %v1013
  %v1437 = vsel %vm1435, %v919, %v1015
  %v1438 = vsel %vm1435, %v921, %v1017
  %v1439 = vsel %vm1435, %v923, %v1019
  %v1440 = vsel %vm1435, %v925, %v1021
  %v1441 = vsel %vm1435, %v927, %v1023
  %v1442 = vsel %vm1435, %v929, %v1025
  %v1443 = vsel %vm1435, %v931, %v1027
  %v1444 = vsel %vm1435, %v933, %v1029
  %v1445 = vsel %vm1435, %v935, %v1031
  %v1446 = vsel %vm1435, %v937, %v1033
  %v1447 = vsel %vm1435, %v939, %v1035
  %v1448 = vsel %vm1435, %v941, %v1037
  %v1449 = vsel %vm1435, %v943, %v1039
  %v1450 = vsel %vm1435, %v945, %v1041
  %v1451 = vsel %vm1435, %v947, %v1043
  %v1452 = vsel %vm1435, %v949, %v1045
  %v1453 = vsel %vm1435, %v951, %v1047
  %v1454 = vsel %vm1435, %v953, %v1049
  %v1455 = vsel %vm1435, %v955, %v1051
  %v1456 = vsel %vm1435, %v957, %v1053
  %v1457 = vsel %vm1435, %v959, %v1055
  %v1458 = vsel %vm1435, %v961, %v1057
  %v1459 = vsel %vm1435, %v963, %v1059
  %v1460 = vsel %vm1435, %v965, %v1061
  %v1461 = vsel %vm1435, %v967, %v1063
  %v1462 = vsel %vm1435, %v969, %v1065
  %v1463 = vsel %vm1435, %v971, %v1067
  %v1464 = vsel %vm1435, %v973, %v1069
  %v1465 = vsel %vm1435, %v975, %v1071
  %v1466 = vsel %vm1435, %v977, %v1073
  %v1467 = vsel %vm1435, %v979, %v1075
  %vm1468 = vcmask 703488
  %v1469 = vsel %vm1468, %v1436, %v1109
  %v1470 = vsel %vm1468, %v1437, %v1111
  %v1471 = vsel %vm1468, %v1438, %v1113
  %v1472 = vsel %vm1468, %v1439, %v1115
  %v1473 = vsel %vm1468, %v1440, %v1117
  %v1474 = vsel %vm1468, %v1441, %v1119
  %v1475 = vsel %vm1468, %v1442, %v1121
  %v1476 = vsel %vm1468, %v1443, %v1123
  %v1477 = vsel %vm1468, %v1444, %v1125
  %v1478 = vsel %vm1468, %v1445, %v1127
  %v1479 = vsel %vm1468, %v1446, %v1129
  %v1480 = vsel %vm1468, %v1447, %v1131
  %v1481 = vsel %vm1468, %v1448, %v1133
  %v1482 = vsel %vm1468, %v1449, %v1135
  %v1483 = vsel %vm1468, %v1450, %v1137
  %v1484 = vsel %vm1468, %v1451, %v1139
  %v1485 = vsel %vm1468, %v1452, %v1141
  %v1486 = vsel %vm1468, %v1453, %v1143
  %v1487 = vsel %vm1468, %v1454, %v1145
  %v1488 = vsel %vm1468, %v1455, %v1147
  %v1489 = vsel %vm1468, %v1456, %v1149
  %v1490 = vsel %vm1468, %v1457, %v1151
  %v1491 = vsel %vm1468, %v1458, %v1153
  %v1492 = vsel %vm1468, %v1459, %v1155
  %v1493 = vsel %vm1468, %v1460, %v1157
  %v1494 = vsel %vm1468, %v1461, %v1159
  %v1495 = vsel %vm1468, %v1462, %v1161
  %v1496 = vsel %vm1468, %v1463, %v1163
  %v1497 = vsel %vm1468, %v1464, %v1165
  %v1498 = vsel %vm1468, %v1465, %v1167
  %v1499 = vsel %vm1468, %v1466, %v1169
  %v1500 = vsel %vm1468, %v1467, %v1171
  %1501 = vst [vmem:[%s5] sm:$0xff] %v1205
  %1502 = vst [vmem:[%s5 + $0x8] sm:$0xff] %v1337
  %1503 = vst [vmem:[%s5 + $0x10] sm:$0xff] %v1403
  %vm1504 = vcmask 867328
  %1505 = vst.msk [vmem:[%s5 + $0x18] sm:$0xff] %vm1504, %v1469
  %1506 = vst [vmem:[%s5 + $0x20] sm:$0xff] %v1206
  %1507 = vst [vmem:[%s5 + $0x28] sm:$0xff] %v1338
  %1508 = vst [vmem:[%s5 + $0x30] sm:$0xff] %v1404
  %1509 = vst.msk [vmem:[%s5 + $0x38] sm:$0xff] %vm1504, %v1470
  %1510 = vst [vmem:[%s5 + $0x40] sm:$0xff] %v1207
  %1511 = vst [vmem:[%s5 + $0x48] sm:$0xff] %v1339
  %1512 = vst [vmem:[%s5 + $0x50] sm:$0xff] %v1405
  %1513 = vst.msk [vmem:[%s5 + $0x58] sm:$0xff] %vm1504, %v1471
  %1514 = vst [vmem:[%s5 + $0x60] sm:$0xff] %v1208
  %1515 = vst [vmem:[%s5 + $0x68] sm:$0xff] %v1340
  %1516 = vst [vmem:[%s5 + $0x70] sm:$0xff] %v1406
  %1517 = vst.msk [vmem:[%s5 + $0x78] sm:$0xff] %vm1504, %v1472
  %1518 = vst [vmem:[%s5 + $0x80] sm:$0xff] %v1209
  %1519 = vst [vmem:[%s5 + $0x88] sm:$0xff] %v1341
  %1520 = vst [vmem:[%s5 + $0x90] sm:$0xff] %v1407
  %1521 = vst.msk [vmem:[%s5 + $0x98] sm:$0xff] %vm1504, %v1473
  %1522 = vst [vmem:[%s5 + $0xa0] sm:$0xff] %v1210
  %1523 = vst [vmem:[%s5 + $0xa8] sm:$0xff] %v1342
  %1524 = vst [vmem:[%s5 + $0xb0] sm:$0xff] %v1408
  %1525 = vst.msk [vmem:[%s5 + $0xb8] sm:$0xff] %vm1504, %v1474
  %1526 = vst [vmem:[%s5 + $0xc0] sm:$0xff] %v1211
  %1527 = vst [vmem:[%s5 + $0xc8] sm:$0xff] %v1343
  %1528 = vst [vmem:[%s5 + $0xd0] sm:$0xff] %v1409
  %1529 = vst.msk [vmem:[%s5 + $0xd8] sm:$0xff] %vm1504, %v1475
  %1530 = vst [vmem:[%s5 + $0xe0] sm:$0xff] %v1212
  %1531 = vst [vmem:[%s5 + $0xe8] sm:$0xff] %v1344
  %1532 = vst [vmem:[%s5 + $0xf0] sm:$0xff] %v1410
  %1533 = vst.msk [vmem:[%s5 + $0xf8] sm:$0xff] %vm1504, %v1476
  %1534 = vst [vmem:[%s5 + $0x100] sm:$0xff] %v1213
  %1535 = vst [vmem:[%s5 + $0x108] sm:$0xff] %v1345
  %1536 = vst [vmem:[%s5 + $0x110] sm:$0xff] %v1411
  %1537 = vst.msk [vmem:[%s5 + $0x118] sm:$0xff] %vm1504, %v1477
  %1538 = vst [vmem:[%s5 + $0x120] sm:$0xff] %v1214
  %1539 = vst [vmem:[%s5 + $0x128] sm:$0xff] %v1346
  %1540 = vst [vmem:[%s5 + $0x130] sm:$0xff] %v1412
  %1541 = vst.msk [vmem:[%s5 + $0x138] sm:$0xff] %vm1504, %v1478
  %1542 = vst [vmem:[%s5 + $0x140] sm:$0xff] %v1215
  %1543 = vst [vmem:[%s5 + $0x148] sm:$0xff] %v1347
  %1544 = vst [vmem:[%s5 + $0x150] sm:$0xff] %v1413
  %1545 = vst.msk [vmem:[%s5 + $0x158] sm:$0xff] %vm1504, %v1479
  %1546 = vst [vmem:[%s5 + $0x160] sm:$0xff] %v1216
  %1547 = vst [vmem:[%s5 + $0x168] sm:$0xff] %v1348
  %1548 = vst [vmem:[%s5 + $0x170] sm:$0xff] %v1414
  %1549 = vst.msk [vmem:[%s5 + $0x178] sm:$0xff] %vm1504, %v1480
  %1550 = vst [vmem:[%s5 + $0x180] sm:$0xff] %v1217
  %1551 = vst [vmem:[%s5 + $0x188] sm:$0xff] %v1349
  %1552 = vst [vmem:[%s5 + $0x190] sm:$0xff] %v1415
  %1553 = vst.msk [vmem:[%s5 + $0x198] sm:$0xff] %vm1504, %v1481
  %1554 = vst [vmem:[%s5 + $0x1a0] sm:$0xff] %v1218
  %1555 = vst [vmem:[%s5 + $0x1a8] sm:$0xff] %v1350
  %1556 = vst [vmem:[%s5 + $0x1b0] sm:$0xff] %v1416
  %1557 = vst.msk [vmem:[%s5 + $0x1b8] sm:$0xff] %vm1504, %v1482
  %1558 = vst [vmem:[%s5 + $0x1c0] sm:$0xff] %v1219
  %1559 = vst [vmem:[%s5 + $0x1c8] sm:$0xff] %v1351
  %1560 = vst [vmem:[%s5 + $0x1d0] sm:$0xff] %v1417
  %1561 = vst.msk [vmem:[%s5 + $0x1d8] sm:$0xff] %vm1504, %v1483
  %1562 = vst [vmem:[%s5 + $0x1e0] sm:$0xff] %v1220
  %1563 = vst [vmem:[%s5 + $0x1e8] sm:$0xff] %v1352
  %1564 = vst [vmem:[%s5 + $0x1f0] sm:$0xff] %v1418
  %1565 = vst.msk [vmem:[%s5 + $0x1f8] sm:$0xff] %vm1504, %v1484
  %1566 = vst [vmem:[%s5 + $0x200] sm:$0xff] %v1221
  %1567 = vst [vmem:[%s5 + $0x208] sm:$0xff] %v1353
  %1568 = vst [vmem:[%s5 + $0x210] sm:$0xff] %v1419
  %1569 = vst.msk [vmem:[%s5 + $0x218] sm:$0xff] %vm1504, %v1485
  %1570 = vst [vmem:[%s5 + $0x220] sm:$0xff] %v1222
  %1571 = vst [vmem:[%s5 + $0x228] sm:$0xff] %v1354
  %1572 = vst [vmem:[%s5 + $0x230] sm:$0xff] %v1420
  %1573 = vst.msk [vmem:[%s5 + $0x238] sm:$0xff] %vm1504, %v1486
  %1574 = vst [vmem:[%s5 + $0x240] sm:$0xff] %v1223
  %1575 = vst [vmem:[%s5 + $0x248] sm:$0xff] %v1355
  %1576 = vst [vmem:[%s5 + $0x250] sm:$0xff] %v1421
  %1577 = vst.msk [vmem:[%s5 + $0x258] sm:$0xff] %vm1504, %v1487
  %1578 = vst [vmem:[%s5 + $0x260] sm:$0xff] %v1224
  %1579 = vst [vmem:[%s5 + $0x268] sm:$0xff] %v1356
  %1580 = vst [vmem:[%s5 + $0x270] sm:$0xff] %v1422
  %1581 = vst.msk [vmem:[%s5 + $0x278] sm:$0xff] %vm1504, %v1488
  %1582 = vst [vmem:[%s5 + $0x280] sm:$0xff] %v1225
  %1583 = vst [vmem:[%s5 + $0x288] sm:$0xff] %v1357
  %1584 = vst [vmem:[%s5 + $0x290] sm:$0xff] %v1423
  %1585 = vst.msk [vmem:[%s5 + $0x298] sm:$0xff] %vm1504, %v1489
  %1586 = vst [vmem:[%s5 + $0x2a0] sm:$0xff] %v1226
  %1587 = vst [vmem:[%s5 + $0x2a8] sm:$0xff] %v1358
  %1588 = vst [vmem:[%s5 + $0x2b0] sm:$0xff] %v1424
  %1589 = vst.msk [vmem:[%s5 + $0x2b8] sm:$0xff] %vm1504, %v1490
  %1590 = vst [vmem:[%s5 + $0x2c0] sm:$0xff] %v1227
  %1591 = vst [vmem:[%s5 + $0x2c8] sm:$0xff] %v1359
  %1592 = vst [vmem:[%s5 + $0x2d0] sm:$0xff] %v1425
  %1593 = vst.msk [vmem:[%s5 + $0x2d8] sm:$0xff] %vm1504, %v1491
  %1594 = vst [vmem:[%s5 + $0x2e0] sm:$0xff] %v1228
  %1595 = vst [vmem:[%s5 + $0x2e8] sm:$0xff] %v1360
  %1596 = vst [vmem:[%s5 + $0x2f0] sm:$0xff] %v1426
  %1597 = vst.msk [vmem:[%s5 + $0x2f8] sm:$0xff] %vm1504, %v1492
  %1598 = vst [vmem:[%s5 + $0x300] sm:$0xff] %v1229
  %1599 = vst [vmem:[%s5 + $0x308] sm:$0xff] %v1361
  %1600 = vst [vmem:[%s5 + $0x310] sm:$0xff] %v1427
  %1601 = vst.msk [vmem:[%s5 + $0x318] sm:$0xff] %vm1504, %v1493
  %1602 = vst [vmem:[%s5 + $0x320] sm:$0xff] %v1230
  %1603 = vst [vmem:[%s5 + $0x328] sm:$0xff] %v1362
  %1604 = vst [vmem:[%s5 + $0x330] sm:$0xff] %v1428
  %1605 = vst.msk [vmem:[%s5 + $0x338] sm:$0xff] %vm1504, %v1494
  %1606 = vst [vmem:[%s5 + $0x340] sm:$0xff] %v1231
  %1607 = vst [vmem:[%s5 + $0x348] sm:$0xff] %v1363
  %1608 = vst [vmem:[%s5 + $0x350] sm:$0xff] %v1429
  %1609 = vst.msk [vmem:[%s5 + $0x358] sm:$0xff] %vm1504, %v1495
  %1610 = vst [vmem:[%s5 + $0x360] sm:$0xff] %v1232
  %1611 = vst [vmem:[%s5 + $0x368] sm:$0xff] %v1364
  %1612 = vst [vmem:[%s5 + $0x370] sm:$0xff] %v1430
  %1613 = vst.msk [vmem:[%s5 + $0x378] sm:$0xff] %vm1504, %v1496
  %1614 = vst [vmem:[%s5 + $0x380] sm:$0xff] %v1233
  %1615 = vst [vmem:[%s5 + $0x388] sm:$0xff] %v1365
  %1616 = vst [vmem:[%s5 + $0x390] sm:$0xff] %v1431
  %1617 = vst.msk [vmem:[%s5 + $0x398] sm:$0xff] %vm1504, %v1497
  %1618 = vst [vmem:[%s5 + $0x3a0] sm:$0xff] %v1234
  %1619 = vst [vmem:[%s5 + $0x3a8] sm:$0xff] %v1366
  %1620 = vst [vmem:[%s5 + $0x3b0] sm:$0xff] %v1432
  %1621 = vst.msk [vmem:[%s5 + $0x3b8] sm:$0xff] %vm1504, %v1498
  %1622 = vst [vmem:[%s5 + $0x3c0] sm:$0xff] %v1235
  %1623 = vst [vmem:[%s5 + $0x3c8] sm:$0xff] %v1367
  %1624 = vst [vmem:[%s5 + $0x3d0] sm:$0xff] %v1433
  %1625 = vst.msk [vmem:[%s5 + $0x3d8] sm:$0xff] %vm1504, %v1499
  %1626 = vst [vmem:[%s5 + $0x3e0] sm:$0x3] %v1236
  %1627 = vst [vmem:[%s5 + $0x3e8] sm:$0x3] %v1368
  %1628 = vst [vmem:[%s5 + $0x3f0] sm:$0x3] %v1434
  %vm1629 = vcmask 861184
  %1630 = vst.msk [vmem:[%s5 + $0x3f8] sm:$0x3] %vm1629, %v1500
  // Predicated region
  $region22: #{tpu_custom_call.1} parent=0 // pred_check
    _
  $region23: #{tpu_custom_call.1} parent=0 // pred_check_branch
    %1632 = sbr.rel (0) target = $region25
  $region24: #{tpu_custom_call.1} parent=0 // pred_region
    _
  $region25: #{tpu_custom_call.1} parent=0 // pred_fallthru
    _
  // Predicated region
  $region26: #{tpu_custom_call.1} parent=0 // pred_check
    _
  $region27: #{tpu_custom_call.1} parent=0 // pred_check_branch
    %1634 = sbr.rel (0) target = $region29
  $region28: #{tpu_custom_call.1} parent=0 // pred_region
    _
  $region29: #{tpu_custom_call.1} parent=0 // pred_fallthru
    _

</llo_original>
